<compile_context>
chip_gen: v7x
topology: tpu7x:2x2x1
jax: 0.10.0
libtpu: 0.0.40
codegen_flags: <defaults>
</compile_context>

<pallas_src>
import jax
import jax.numpy as jnp
from jax.experimental import pallas as pl
from jax.experimental.pallas import tpu as pltpu

IN_FEATURES = 16
OUT_FEATURES = 32
OUT_PADDED = 128          # lane-dense width (TPU lane count)
MAX_BATCH_TILE = 1024     # rows per grid step for large batches (multiple of 8)


def _linear_relu_kernel(x_ref, w_ref, b_ref, o_ref):
    # `other is None` branch: v3 = relu(x @ W^T + b + 0) -- no zeros input DMA'd.
    v = jnp.dot(x_ref[...], w_ref[...], preferred_element_type=jnp.float32)
    v = v + b_ref[...]                              # (1, 128) bias broadcast
    o_ref[...] = jnp.maximum(v, 0.0).astype(o_ref.dtype)


def _linear_add_relu_kernel(x_ref, w_ref, b_ref, other_ref, o_ref):
    # `other` given branch: v3 = relu(x @ W^T + b + other)
    v = jnp.dot(x_ref[...], w_ref[...], preferred_element_type=jnp.float32)
    v = v + b_ref[...] + other_ref[...]
    o_ref[...] = jnp.maximum(v, 0.0).astype(o_ref.dtype)


def prepare_params(w, b):
    """One-time parameter prep (hoisted out of the per-call path):
    transpose the PyTorch (OUT, IN) weight to (IN, OUT) and zero-pad the
    output dim to 128 lanes; pad the bias the same way.  Padded columns are
    exactly zero, so relu(0 + 0) == 0 and they are sliced off after the call.
    """
    w_t = jnp.pad(w.T.astype(jnp.float32),
                  ((0, 0), (0, OUT_PADDED - OUT_FEATURES)))          # (16, 128)
    b_p = jnp.pad(b.astype(jnp.float32).reshape(1, OUT_FEATURES),
                  ((0, 0), (0, OUT_PADDED - OUT_FEATURES)))          # (1, 128)
    return w_t, b_p


@jax.jit
def linear_add_relu(x, w_padded, b_padded, other=None):
    """Pallas equivalent of Model.forward.

    x:        (B, IN)            float32
    w_padded: (IN, OUT_PADDED)   float32  (from prepare_params, one-time)
    b_padded: (1, OUT_PADDED)    float32  (from prepare_params, one-time)
    other:    (B, OUT) float32 or None
    returns:  (B, OUT) float32
    """
    B = x.shape[0]
    # Single block for small batches (block == full dims is always legal);
    # for large batches tile in multiples of 8 so BlockSpec double-buffering
    # overlaps the x/other DMA with compute and megacore can split the grid.
    tb = B if B <= MAX_BATCH_TILE else MAX_BATCH_TILE
    grid = (pl.cdiv(B, tb),)

    x_spec = pl.BlockSpec((tb, IN_FEATURES), lambda i: (i, 0))
    w_spec = pl.BlockSpec((IN_FEATURES, OUT_PADDED), lambda i: (0, 0))  # VMEM-resident
    b_spec = pl.BlockSpec((1, OUT_PADDED), lambda i: (0, 0))            # VMEM-resident
    out_spec = pl.BlockSpec((tb, OUT_PADDED), lambda i: (i, 0))
    out_shape = jax.ShapeDtypeStruct((B, OUT_PADDED), x.dtype)
    compiler_params = pltpu.CompilerParams(
        # batch tiles are independent -> parallel (lets v7x shard across 2 TCs)
        dimension_semantics=("parallel",),
    )

    # NOTE: at tiny B this op is launch-overhead bound; in production it should
    # be fused into the surrounding graph or batched with sibling layers.
    if other is None:
        # Dedicated variant: no synthesized zeros `other` in HBM (~30% fewer bytes).
        out = pl.pallas_call(
            _linear_relu_kernel,
            out_shape=out_shape,
            grid_spec=pltpu.PrefetchScalarGridSpec(
                num_scalar_prefetch=0,
                grid=grid,
                in_specs=[x_spec, w_spec, b_spec],
                out_specs=out_spec,
            ),
            compiler_params=compiler_params,
        )(x, w_padded, b_padded)
    else:
        # Zero-pad `other` so the add and the output store stay lane-dense.
        other_p = jnp.pad(other.astype(x.dtype),
                          ((0, 0), (0, OUT_PADDED - OUT_FEATURES)))
        other_spec = pl.BlockSpec((tb, OUT_PADDED), lambda i: (i, 0))
        out = pl.pallas_call(
            _linear_add_relu_kernel,
            out_shape=out_shape,
            grid_spec=pltpu.PrefetchScalarGridSpec(
                num_scalar_prefetch=0,
                grid=grid,
                in_specs=[x_spec, w_spec, b_spec, other_spec],
                out_specs=out_spec,
            ),
            compiler_params=compiler_params,
        )(x, w_padded, b_padded, other_p)

    # Padded lanes 32..127 are exactly zero; strip them.
    return out[:, :OUT_FEATURES]


if __name__ == "__main__":
    key = jax.random.PRNGKey(0)
    kx, kw, kb, ko = jax.random.split(key, 4)

    B = 2  # module example uses (1, 16); any B works
    x = jax.random.normal(kx, (B, IN_FEATURES), dtype=jnp.float32)
    # Deterministic parameter init (mimics nn.Linear uniform(-1/sqrt(16), 1/sqrt(16)))
    bound = 1.0 / jnp.sqrt(jnp.float32(IN_FEATURES))
    w = jax.random.uniform(kw, (OUT_FEATURES, IN_FEATURES),
                           minval=-bound, maxval=bound, dtype=jnp.float32)
    b = jax.random.uniform(kb, (OUT_FEATURES,),
                           minval=-bound, maxval=bound, dtype=jnp.float32)
    other = jax.random.normal(ko, (B, OUT_FEATURES), dtype=jnp.float32)

    # One-time: hoist the transpose + lane padding out of the call path.
    w_padded, b_padded = prepare_params(w, b)

    # Branch 1: other is None  (v2 = v1 + 0) -- dedicated kernel, no zeros DMA.
    out_none = linear_add_relu(x, w_padded, b_padded)
    # Branch 2: other provided.
    out_other = linear_add_relu(x, w_padded, b_padded, other)
    jax.block_until_ready((out_none, out_other))

    # Reference check in plain JAX
    ref_none = jnp.maximum(x @ w.T + b, 0.0)
    ref_other = jnp.maximum(x @ w.T + b + other, 0.0)
    assert out_none.shape == (B, OUT_FEATURES)
    assert out_other.shape == (B, OUT_FEATURES)
    assert jnp.allclose(out_none, ref_none, atol=1e-5), "mismatch (other=None)"
    assert jnp.allclose(out_other, ref_other, atol=1e-5), "mismatch (other given)"

    print("KERNEL_OK")
</pallas_src>

<mosaic_0001>
module attributes {stable_mosaic.version = 11 : i64} {
  func.func @_linear_relu_kernel(%arg0: i32, %arg1: memref<2x16xf32, #tpu.memory_space<vmem>>, %arg2: memref<16x128xf32, #tpu.memory_space<vmem>>, %arg3: memref<1x128xf32, #tpu.memory_space<vmem>>, %arg4: memref<2x128xf32, #tpu.memory_space<vmem>>) attributes {dimension_semantics = [#tpu.dimension_semantics<parallel>], iteration_bounds = array<i64: 1>, scalar_prefetch = 0 : i64, scratch_operands = 0 : i64, tpu.core_type = #tpu.core_type<tc>, window_params = [{transform_indices = @transform_0, window_bounds = array<i64: 2, 16>}, {pipeline_mode = #tpu.pipeline_mode<synchronous>, transform_indices = @transform_1, window_bounds = array<i64: 16, 128>}, {pipeline_mode = #tpu.pipeline_mode<synchronous>, transform_indices = @transform_2, window_bounds = array<i64: 1, 128>}, {transform_indices = @transform_3, window_bounds = array<i64: 2, 128>}]} {
    %c0 = arith.constant 0 : index
    %c0_0 = arith.constant 0 : index
    %0 = vector.load %arg1[%c0, %c0_0] : memref<2x16xf32, #tpu.memory_space<vmem>>, vector<2x16xf32>
    %c0_1 = arith.constant 0 : index
    %c0_2 = arith.constant 0 : index
    %1 = vector.load %arg2[%c0_1, %c0_2] : memref<16x128xf32, #tpu.memory_space<vmem>>, vector<16x128xf32>
    %cst = arith.constant dense<0.000000e+00> : vector<2x128xf32>
    %2 = tpu.matmul %0, %1, %cst {dimension_numbers = #tpu.dot_dimension_numbers<[1], [0], [0], [1], [0, 0, 1, 1], [], []>} : vector<2x16xf32>, vector<16x128xf32>, vector<2x128xf32> -> vector<2x128xf32>
    %c0_3 = arith.constant 0 : index
    %c0_4 = arith.constant 0 : index
    %3 = vector.load %arg3[%c0_3, %c0_4] : memref<1x128xf32, #tpu.memory_space<vmem>>, vector<1x128xf32>
    %4 = vector.broadcast %3 : vector<1x128xf32> to vector<2x128xf32>
    %5 = arith.addf %2, %4 : vector<2x128xf32>
    %cst_5 = arith.constant 0.000000e+00 : f32
    %6 = vector.broadcast %cst_5 : f32 to vector<2x128xf32>
    %7 = arith.maximumf %5, %6 : vector<2x128xf32>
    %c0_6 = arith.constant 0 : index
    %c0_7 = arith.constant 0 : index
    %8 = vector.load %arg4[%c0_6, %c0_7] : memref<2x128xf32, #tpu.memory_space<vmem>>, vector<2x128xf32>
    tpu.vector_store %arg4[%c0_6, %c0_7], %7 {strides = array<i32>} : memref<2x128xf32, #tpu.memory_space<vmem>>, vector<2x128xf32>,
    return
  }
  func.func @transform_0(%arg0: i32) -> (i32, i32) {
    %c0_i32 = arith.constant 0 : i32
    %c0_i32_0 = arith.constant 0 : i32
    return %arg0, %c0_i32 : i32, i32
  }
  func.func @transform_1(%arg0: i32) -> (i32, i32) {
    %c0_i32 = arith.constant 0 : i32
    %c0_i32_0 = arith.constant 0 : i32
    %c0_i32_1 = arith.constant 0 : i32
    return %c0_i32, %c0_i32_0 : i32, i32
  }
  func.func @transform_2(%arg0: i32) -> (i32, i32) {
    %c0_i32 = arith.constant 0 : i32
    %c0_i32_0 = arith.constant 0 : i32
    %c0_i32_1 = arith.constant 0 : i32
    return %c0_i32, %c0_i32_0 : i32, i32
  }
  func.func @transform_3(%arg0: i32) -> (i32, i32) {
    %c0_i32 = arith.constant 0 : i32
    %c0_i32_0 = arith.constant 0 : i32
    return %arg0, %c0_i32 : i32, i32
  }
}

</mosaic_0001>

<llo_original>
// kernel: linear_add_relu.1
$region0: #{linear_add_relu.1}
  #allocation0 [shape = 'u32[]', space=smem, size = 0x4, offset = 0x4, fixed_abs, tag = 'smem constant byte address 0x4 - core index']
  #allocation1 [shape = 'u32[144,128]{1,0:T(1,128)}', space=vmem, size = 0x12000, scoped, tag = 'internal scratch']
  %s0 = inlined_call_operand.hbm [shape: f32[2,16], index: 0, kind: input, shape index: {}]
  %s1 = inlined_call_operand.hbm [shape: f32[16,128], index: 1, kind: input, shape index: {}]
  %s2 = inlined_call_operand.vmem [shape: f32[1,128], index: 2, kind: input, shape index: {}]
  %s3 = inlined_call_operand.hbm [shape: f32[2,128], index: 3, kind: output, shape index: {}]
  %s4 = sld [smem:[#allocation0]]
  $region30: #{linear_add_relu.1} parent=0
    _
  %s6 = ssub.s32 1, %s4
  %s7 = scalar_select 0, %s6, %s4
  $region1: #{linear_add_relu.1} parent=0
    #allocation2 [shape = 'u8[1024]{0}', space=vmem, size = 0x400, scoped, tag = 'input window, operand 0, single buffered']
    #allocation3 [shape = 's32[1]{0}', space=sflag, size = 0x4, scoped, tag = 'scoped memory for linear_add_relu.1']
    #allocation4 [shape = 's32[1]{0}', space=sflag, size = 0x4, scoped, tag = 'scoped memory for linear_add_relu.1']
    #allocation5 [shape = 'u8[8192]{0}', space=vmem, size = 0x2000, scoped, tag = 'input window, operand 1, single buffered']
    #allocation6 [shape = 's32[1]{0}', space=sflag, size = 0x4, scoped, tag = 'scoped memory for linear_add_relu.1']
    #allocation7 [shape = 'u8[1024]{0}', space=vmem, size = 0x400, scoped, tag = 'output window, operand 0, single buffered']
    %8 = vsyncpa [#allocation3], 0
    %9 = vsyncpa [#allocation6], 0
    %10 = vsyncpa [#allocation4], 0
    // Predicated region
    $region2: #{linear_add_relu.1} parent=1 // pred_check
      _
    $region3: #{linear_add_relu.1} parent=1 // pred_check_branch
      %12 = sbr.rel (0) target = $region5
    $region4: #{linear_add_relu.1} parent=1 // pred_region
      %s14 = ssub.s32 32, 32
      %15 = vsyncadd [#allocation3], %s14
      %s17 = sshll.u32 [#allocation2], 4
      %s18 = int_to_ptr.vmem [resolvable:$true] %s17
      %20 = dma.hbm_to_vmem [thread:$0]  %s0, 32, %s18, [#allocation3]
    $region5: #{linear_add_relu.1} parent=1 // pred_fallthru
      _
    // Predicated region
    $region6: #{linear_add_relu.1} parent=1 // pred_check
      _
    $region7: #{linear_add_relu.1} parent=1 // pred_check_branch
      %22 = sbr.rel (0) target = $region9
    $region8: #{linear_add_relu.1} parent=1 // pred_region
      %s24 = ssub.s32 256, 256
      %25 = vsyncadd [#allocation6], %s24
      %s26 = sshll.u32 [#allocation5], 4
      %s27 = int_to_ptr.vmem [resolvable:$true] %s26
      %32 = dma.hbm_to_vmem [thread:$0]  %s1, 256, %s27, [#allocation6], 128, 128, 8
    $region9: #{linear_add_relu.1} parent=1 // pred_fallthru
      _
    // Predicated region
    $region10: #{linear_add_relu.1} parent=1 // pred_check
      _
    $region11: #{linear_add_relu.1} parent=1 // pred_check_branch
      %34 = sbr.rel (0) target = $region13
    $region12: #{linear_add_relu.1} parent=1 // pred_region
      _
    $region13: #{linear_add_relu.1} parent=1 // pred_fallthru
      _
    // Predicated region
    $region14: #{linear_add_relu.1} parent=1 // pred_check
      _
    $region15: #{linear_add_relu.1} parent=1 // pred_check_branch
      %36 = sbr.rel (0) target = $region17
    $region16: #{linear_add_relu.1} parent=1 // pred_region
      %37 = dma.done [#allocation3], 32
    $region17: #{linear_add_relu.1} parent=1 // pred_fallthru
      _
    // Predicated region
    $region18: #{linear_add_relu.1} parent=1 // pred_check
      _
    $region19: #{linear_add_relu.1} parent=1 // pred_check_branch
      %39 = sbr.rel (0) target = $region21
    $region20: #{linear_add_relu.1} parent=1 // pred_region
      %40 = dma.done [#allocation6], 256
    $region21: #{linear_add_relu.1} parent=1 // pred_fallthru
      _
    %v41 = vld [vmem:[#allocation2] sm:$0x3]
    %v42 = vld [vmem:[#allocation5] sm:$0xff]
    %v43 = vld [vmem:[#allocation5 + $0x8] sm:$0xff]
    %v44 = vld [vmem:[%s2] sm:$0x1]
    %v46 = vlaneseq
    %v47 = vshrl.u32 %v46, 7
    %v48 = vsub.s32 0, %v47
    %v49 = vrot.slane %v44, %v48
    %vm51 = vcmask 130048
    %v53 = vsel %vm51, %v41, 0
    %55 = vmatprep.subr.mxu0 0.0
    %56 = vmatpush1.msra.mxu0 %v42
    %57 = vmatprep.subr.mxu0 0.0
    %58 = vmatpush1.msra.mxu0 %v43
    %59 = vmatprep.subr.mxu0 0.0
    %60 = vmatpush1.msra.mxu0 0.0
    %61 = vmatprep.subr.mxu0 0.0
    %62 = vmatpush1.msra.mxu0 0.0
    %63 = vmatprep.subr.mxu0 0.0
    %64 = vmatpush1.msra.mxu0 0.0
    %65 = vmatprep.subr.mxu0 0.0
    %66 = vmatpush1.msra.mxu0 0.0
    %67 = vmatprep.subr.mxu0 0.0
    %68 = vmatpush1.msra.mxu0 0.0
    %69 = vmatprep.subr.mxu0 0.0
    %70 = vmatpush1.msra.mxu0 0.0
    %71 = vmatprep.subr.mxu0 0.0
    %72 = vmatpush1.msra.mxu0 0.0
    %73 = vmatprep.subr.mxu0 0.0
    %74 = vmatpush1.msra.mxu0 0.0
    %75 = vmatprep.subr.mxu0 0.0
    %76 = vmatpush1.msra.mxu0 0.0
    %77 = vmatprep.subr.mxu0 0.0
    %78 = vmatpush1.msra.mxu0 0.0
    %79 = vmatprep.subr.mxu0 0.0
    %80 = vmatpush1.msra.mxu0 0.0
    %81 = vmatprep.subr.mxu0 0.0
    %82 = vmatpush1.msra.mxu0 0.0
    %83 = vmatprep.subr.mxu0 0.0
    %84 = vmatpush1.msra.mxu0 0.0
    %85 = vmatprep.subr.mxu0 0.0
    %86 = vmatpush1.msra.mxu0 0.0
    %87 = vmatprep.subr.mxu0 0.0
    %88 = vmatpush1.msra.mxu0 0.0
    %89 = vmatprep.subr.mxu0 0.0
    %90 = vmatpush1.msra.mxu0 0.0
    %91 = vmatprep.subr.mxu0 0.0
    %92 = vmatpush1.msra.mxu0 0.0
    %93 = vmatprep.subr.mxu0 0.0
    %94 = vmatpush1.msra.mxu0 0.0
    %95 = vmatprep.subr.mxu0 0.0
    %96 = vmatpush1.msra.mxu0 0.0
    %97 = vmatprep.subr.mxu0 0.0
    %98 = vmatpush1.msra.mxu0 0.0
    %99 = vmatprep.subr.mxu0 0.0
    %100 = vmatpush1.msra.mxu0 0.0
    %101 = vmatprep.subr.mxu0 0.0
    %102 = vmatpush1.msra.mxu0 0.0
    %103 = vmatprep.subr.mxu0 0.0
    %104 = vmatpush1.msra.mxu0 0.0
    %105 = vmatprep.subr.mxu0 0.0
    %106 = vmatpush1.msra.mxu0 0.0
    %107 = vmatprep.subr.mxu0 0.0
    %108 = vmatpush1.msra.mxu0 0.0
    %109 = vmatprep.subr.mxu0 0.0
    %110 = vmatpush1.msra.mxu0 0.0
    %111 = vmatprep.subr.mxu0 0.0
    %112 = vmatpush1.msra.mxu0 0.0
    %113 = vmatprep.subr.mxu0 0.0
    %114 = vmatpush1.msra.mxu0 0.0
    %115 = vmatprep.subr.mxu0 0.0
    %116 = vmatpush1.msra.mxu0 0.0
    %117 = vmatprep.subr.mxu0 0.0
    %118 = vmatpush1.msra.mxu0 0.0
    %119 = vmatprep.mubr.f32.mxu0 0.0
    %120 = vmatmul.mubr.f32.gmra.mrb[0].mxu0 %v53
    %v121 = vpop.f32.mrb[0].mxu0
    %v122 = vadd.f32 %v49, %v121
    %v123 = vpop.f32.mrb[0].mxu0
    %124 = vdwg.mxu0
    %v125 = vmax.f32 %v122, 0.0
    %126 = vst [vmem:[#allocation7] sm:$0x3] %v125
    // Predicated region
    $region22: #{linear_add_relu.1} parent=1 // pred_check
      _
    $region23: #{linear_add_relu.1} parent=1 // pred_check_branch
      %128 = sbr.rel (0) target = $region25
    $region24: #{linear_add_relu.1} parent=1 // pred_region
      %s130 = ssub.s32 32, 32
      %131 = vsyncadd [#allocation4], %s130
      %s133 = sshll.u32 [#allocation7], 4
      %s134 = int_to_ptr.vmem [resolvable:$true] %s133
      %136 = dma.vmem_to_hbm [thread:$0]  %s134, 32, %s3, [#allocation4]
    $region25: #{linear_add_relu.1} parent=1 // pred_fallthru
      _
    // Predicated region
    $region26: #{linear_add_relu.1} parent=1 // pred_check
      _
    $region27: #{linear_add_relu.1} parent=1 // pred_check_branch
      %138 = sbr.rel (0) target = $region29
    $region28: #{linear_add_relu.1} parent=1 // pred_region
      %139 = dma.done [#allocation4], 32
    $region29: #{linear_add_relu.1} parent=1 // pred_fallthru
      _
    %140 = vsyncpa [#allocation3], 1
    %141 = vsyncpa [#allocation6], 1
    %142 = vsyncpa [#allocation4], 1

</llo_original>
